<compile_context>
chip_gen: v6e
topology: v6e:2x2x1
jax: 0.10.0
libtpu: 0.0.40
codegen_flags: <defaults>
</compile_context>

<pallas_src>
import functools

import jax
import jax.numpy as jnp
from jax import lax
from jax.experimental import pallas as pl
from jax.experimental.pallas import tpu as pltpu


_SQRT_2_OVER_PI = 0.7978845608028654


def _mlp_kernel(x_ref, w_fc_ref, b_fc_ref, w_proj_ref, b_proj_ref, o_ref,
                acc_ref, *, hc, n_chunks, gelu_dtype):
    """Grid = (M tiles, H tiles).  One (tm, C) output tile per M index.

    x_ref:      (tm, C)   activation tile (resident across the H axis)
    w_fc_ref:   (C, th)   slice of the fc weight
    b_fc_ref:   (1, th)   slice of the fc bias
    w_proj_ref: (th, C)   slice of the proj weight
    b_proj_ref: (1, C)    proj bias
    o_ref:      (tm, C)   output tile
    acc_ref:    (tm, C)   f32 accumulator scratch
    """
    k = pl.program_id(1)

    @pl.when(k == 0)
    def _():
        acc_ref[...] = jnp.zeros_like(acc_ref)

    x = x_ref[...]
    proj_dtype = w_proj_ref.dtype

    def chunk(c, carry):
        # Bound the live f32 intermediate to (tm, hc) instead of (tm, th).
        j = pl.multiple_of(c * hc, hc)
        h = jnp.dot(x, w_fc_ref[:, pl.ds(j, hc)],
                    preferred_element_type=jnp.float32)
        h = h + b_fc_ref[:, pl.ds(j, hc)].astype(jnp.float32)
        h = h.astype(gelu_dtype)
        # tanh-approx GELU; inner polynomial factored: h + a*h^3 = h*(1 + a*h*h)
        inner = h * (1.0 + 0.044715 * h * h)
        g = 0.5 * h * (1.0 + jnp.tanh(_SQRT_2_OVER_PI * inner))
        acc_ref[...] += jnp.dot(g.astype(proj_dtype),
                                w_proj_ref[pl.ds(j, hc), :],
                                preferred_element_type=jnp.float32)
        return carry

    lax.fori_loop(0, n_chunks, chunk, 0, unroll=True)

    @pl.when(k == pl.num_programs(1) - 1)
    def _():
        y = acc_ref[...] + b_proj_ref[...].astype(jnp.float32)
        o_ref[...] = y.astype(o_ref.dtype)


def _round_up(x, m):
    return (x + m - 1) // m * m


def _detect_chip():
    try:
        kind = jax.devices()[0].device_kind.lower()
    except Exception:
        return "unknown"
    if "v7" in kind:
        return "v7x"
    if "v6" in kind:
        return "v6e"
    if "v5" in kind:
        return "v5"
    return "unknown"


def _vmem_capacity_bytes(chip):
    try:
        cap = int(pltpu.get_tpu_info().vmem_capacity_bytes)
        if cap > 0:
            return cap
    except Exception:
        pass
    return {"v7x": 64 << 20, "v6e": 128 << 20, "v5": 128 << 20}.get(chip, 64 << 20)


def _choose_hc(th):
    """Largest H sub-chunk <= 512 (multiple of 128) dividing th."""
    for cand in (512, 384, 256, 128):
        if th % cand == 0:
            return cand
    return th


def _balanced_tm(M, tm_target, min_tiles=1):
    """Even-ish M tiles (multiple of 8), padding bounded by 8 rows per tile."""
    n_m = max(min_tiles, -(-M // max(tm_target, 8)))
    return max(8, _round_up(-(-M // n_m), 8))


@functools.partial(jax.jit, static_argnames=("tm", "th"))
def mlp_forward(x, w_fc, b_fc, w_proj, b_proj, *, tm=None, th=None):
    """x: (B, T, C) -> (B, T, C).  Weights are (in, out) = nn.Linear weight^T."""
    B, T, C = x.shape
    H = w_fc.shape[1]                       # 4 * C
    M = B * T
    x_item = x.dtype.itemsize
    w_item = w_fc.dtype.itemsize

    chip = _detect_chip()
    vmem_cap = _vmem_capacity_bytes(chip)
    budget = int(vmem_cap * 0.80)           # leave room for compiler scratch
    min_tiles = 2 if (chip == "v7x" and _round_up(M, 8) >= 16) else 1

    def footprint(tm_, th_, n_buf):
        hc_ = _choose_hc(th_)
        return (n_buf * 2 * C * th_ * w_item        # w_fc + w_proj slices
                + 4 * tm_ * C * x_item              # x + out, double-buffered
                + tm_ * C * 4                       # f32 accumulator
                + 3 * tm_ * hc_ * 4                 # live GELU intermediate
                + (4 << 20))                        # biases / sems / misc slack

    # ---- choose (tm, th): weights resident whenever this chip's VMEM allows,
    #      otherwise stream H slices with a roofline-sized M tile.
    if th is None:
        tm_res = _balanced_tm(M, 256 if tm is None else tm, min_tiles)
        if footprint(tm_res, H, 1) <= budget:
            tm_sel, th_sel, n_buf = tm_res, H, 1
        else:
            tm_target = ({"v6e": 768, "v5": 512, "v7x": 512}.get(chip, 512)
                         if tm is None else tm)
            tm_sel = _balanced_tm(M, tm_target, min_tiles)
            n_buf = 2
            th_sel = H
            while th_sel > 128 and footprint(tm_sel, th_sel, n_buf) > budget:
                nxt = th_sel // 2
                if H % nxt != 0 or nxt % 128 != 0:
                    break
                th_sel = nxt
            # Deeper weight buffering when streaming and 128 MiB VMEM has room.
            if chip in ("v5", "v6e") and footprint(tm_sel, th_sel, 3) <= budget:
                n_buf = 3
    else:
        tm_sel = _balanced_tm(M, 256 if tm is None else tm, min_tiles)
        th_sel = th
        n_buf = 1 if th_sel == H else 2

    assert H % th_sel == 0
    n_h = H // th_sel
    hc = _choose_hc(th_sel)
    n_chunks = th_sel // hc

    M_pad = _round_up(M, tm_sel)
    n_m = M_pad // tm_sel

    x2d = x.reshape(M, C)
    if M_pad != M:
        x2d = jnp.pad(x2d, ((0, M_pad - M), (0, 0)))

    b_fc2 = b_fc.reshape(1, H)
    b_proj2 = b_proj.reshape(1, C)

    # GELU in bf16 on chips with bf16 VPU/EUP (v6e/v7x); f32 elsewhere (v5e).
    if chip in ("v6e", "v7x") and x.dtype == jnp.bfloat16:
        gelu_dtype = jnp.bfloat16
    else:
        gelu_dtype = jnp.float32

    resident = pl.Buffered(1)              # constant-index blocks: DMA'd once
    w_mode = resident if n_h == 1 else pl.Buffered(n_buf)

    in_specs = [
        pl.BlockSpec((tm_sel, C), lambda i, k: (i, 0)),                        # x
        pl.BlockSpec((C, th_sel), lambda i, k: (0, k), pipeline_mode=w_mode),  # w_fc
        pl.BlockSpec((1, th_sel), lambda i, k: (0, k), pipeline_mode=w_mode),  # b_fc
        pl.BlockSpec((th_sel, C), lambda i, k: (k, 0), pipeline_mode=w_mode),  # w_proj
        pl.BlockSpec((1, C), lambda i, k: (0, 0), pipeline_mode=resident),     # b_proj
    ]

    # Scoped-VMEM limit: actual footprint + headroom, capped at 85% of physical
    # (on v7x that is ~54 MiB, never the full 64 MiB).
    vmem_limit = footprint(tm_sel, th_sel, n_buf) + (8 << 20)
    vmem_limit = int(min(max(vmem_limit, 32 << 20), int(vmem_cap * 0.85)))

    # Bytes: activations once; weights re-streamed per M tile when n_h > 1.
    w_passes = 1 if n_h == 1 else n_m
    cost = pl.CostEstimate(
        flops=4 * M_pad * C * H,                     # two matmuls
        transcendentals=M_pad * H,                   # tanh in the GELU
        bytes_accessed=int(2 * M_pad * C * x_item
                           + w_passes * 2 * C * H * w_item
                           + (H + C) * w_item),
    )

    kernel = functools.partial(_mlp_kernel, hc=hc, n_chunks=n_chunks,
                               gelu_dtype=gelu_dtype)

    out2d = pl.pallas_call(
        kernel,
        out_shape=jax.ShapeDtypeStruct((M_pad, C), x.dtype),
        grid_spec=pltpu.PrefetchScalarGridSpec(
            num_scalar_prefetch=0,
            grid=(n_m, n_h),
            in_specs=in_specs,
            out_specs=pl.BlockSpec((tm_sel, C), lambda i, k: (i, 0)),
            scratch_shapes=[pltpu.VMEM((tm_sel, C), jnp.float32)],
        ),
        compiler_params=pltpu.CompilerParams(
            dimension_semantics=("parallel", "arbitrary"),
            vmem_limit_bytes=vmem_limit,
        ),
        cost_estimate=cost,
    )(x2d, w_fc, b_fc2, w_proj, b_proj2)

    if M_pad != M:
        out2d = out2d[:M]
    return out2d.reshape(B, T, C)


def _gelu_tanh_ref(x):
    return 0.5 * x * (1.0 + jnp.tanh(_SQRT_2_OVER_PI * (x + 0.044715 * x ** 3)))


def mlp_reference(x, w_fc, b_fc, w_proj, b_proj):
    x = x.astype(jnp.float32)
    h = _gelu_tanh_ref(x @ w_fc.astype(jnp.float32) + b_fc.astype(jnp.float32))
    return h @ w_proj.astype(jnp.float32) + b_proj.astype(jnp.float32)


if __name__ == "__main__":
    # Small config consistent with the module: n_embd=C, hidden=4*C.
    B, T, C = 2, 8, 128
    H = 4 * C
    dtype = jnp.bfloat16   # MXU-native inputs; accumulation stays f32 in-kernel.

    key = jax.random.PRNGKey(0)
    k_x, k_wfc, k_bfc, k_wproj, k_bproj = jax.random.split(key, 5)

    x = jax.random.normal(k_x, (B, T, C), dtype=jnp.float32).astype(dtype)
    w_fc = (jax.random.normal(k_wfc, (C, H), dtype=jnp.float32) * 0.02).astype(dtype)
    b_fc = (jax.random.normal(k_bfc, (H,), dtype=jnp.float32) * 0.02).astype(dtype)
    w_proj = (jax.random.normal(k_wproj, (H, C), dtype=jnp.float32) * 0.02).astype(dtype)
    b_proj = (jax.random.normal(k_bproj, (C,), dtype=jnp.float32) * 0.02).astype(dtype)

    out = mlp_forward(x, w_fc, b_fc, w_proj, b_proj)
    out = jax.block_until_ready(out)

    ref = mlp_reference(x, w_fc, b_fc, w_proj, b_proj)
    assert out.shape == (B, T, C)
    err = float(jnp.max(jnp.abs(out.astype(jnp.float32) - ref)))
    # bf16 operands / bf16 GELU on v6e+ -> loosened tolerance (expected
    # mixed-precision behavior, not a bug).
    assert err < 3e-2, f"mismatch vs reference: max abs err {err}"

    print("KERNEL_OK")
</pallas_src>

<mosaic_0001>
module attributes {stable_mosaic.version = 11 : i64} {
  func.func @_mlp_kernel(%arg0: i32, %arg1: i32, %arg2: memref<16x128xbf16, #tpu.memory_space<vmem>>, %arg3: memref<128x512xbf16, #tpu.memory_space<vmem>>, %arg4: memref<1x512xbf16, #tpu.memory_space<vmem>>, %arg5: memref<512x128xbf16, #tpu.memory_space<vmem>>, %arg6: memref<1x128xbf16, #tpu.memory_space<vmem>>, %arg7: memref<16x128xbf16, #tpu.memory_space<vmem>>, %arg8: memref<16x128xf32, #tpu.memory_space<vmem>>) attributes {dimension_semantics = [#tpu.dimension_semantics<parallel>, #tpu.dimension_semantics<arbitrary>], iteration_bounds = array<i64: 1, 1>, scalar_prefetch = 0 : i64, scratch_operands = 1 : i64, tpu.core_type = #tpu.core_type<tc>, window_params = [{transform_indices = @transform_0, window_bounds = array<i64: 16, 128>}, {pipeline_mode = #tpu.pipeline_mode<synchronous>, transform_indices = @transform_1, window_bounds = array<i64: 128, 512>}, {pipeline_mode = #tpu.pipeline_mode<synchronous>, transform_indices = @transform_2, window_bounds = array<i64: 1, 512>}, {pipeline_mode = #tpu.pipeline_mode<synchronous>, transform_indices = @transform_3, window_bounds = array<i64: 512, 128>}, {pipeline_mode = #tpu.pipeline_mode<synchronous>, transform_indices = @transform_4, window_bounds = array<i64: 1, 128>}, {transform_indices = @transform_5, window_bounds = array<i64: 16, 128>}]} {
    %c0_i32 = arith.constant 0 : i32
    %0 = arith.cmpi eq, %arg1, %c0_i32 : i32
    %1 = arith.extui %0 : i1 to i32
    %c0_i32_0 = arith.constant 0 : i32
    %2 = arith.cmpi ne, %1, %c0_i32_0 : i32
    scf.if %2 {
      %cst_18 = arith.constant 0.000000e+00 : f32
      %38 = vector.broadcast %cst_18 : f32 to vector<16x128xf32>
      %c0_19 = arith.constant 0 : index
      %c0_20 = arith.constant 0 : index
      %39 = vector.load %arg8[%c0_19, %c0_20] : memref<16x128xf32, #tpu.memory_space<vmem>>, vector<16x128xf32>
      tpu.vector_store %arg8[%c0_19, %c0_20], %38 {strides = array<i32>} : memref<16x128xf32, #tpu.memory_space<vmem>>, vector<16x128xf32>,
    } else {
    }
    %c0 = arith.constant 0 : index
    %c0_1 = arith.constant 0 : index
    %3 = vector.load %arg2[%c0, %c0_1] : memref<16x128xbf16, #tpu.memory_space<vmem>>, vector<16x128xbf16>
    %c0_i32_2 = arith.constant 0 : i32
    %c512_i32 = arith.constant 512 : i32
    %4 = arith.muli %c0_i32_2, %c512_i32 : i32
    %5 = tpu.assume_multiple %4, 512 : i32
    %c0_3 = arith.constant 0 : index
    %6 = arith.index_cast %5 : i32 to index
    %7 = vector.load %arg3[%c0_3, %6] : memref<128x512xbf16, #tpu.memory_space<vmem>>, vector<128x512xbf16>
    %cst = arith.constant dense<0.000000e+00> : vector<16x512xf32>
    %8 = tpu.matmul %3, %7, %cst {dimension_numbers = #tpu.dot_dimension_numbers<[1], [0], [0], [1], [0, 0, 1, 1], [], []>} : vector<16x128xbf16>, vector<128x512xbf16>, vector<16x512xf32> -> vector<16x512xf32>
    %c0_4 = arith.constant 0 : index
    %9 = arith.index_cast %5 : i32 to index
    %10 = vector.load %arg4[%c0_4, %9] : memref<1x512xbf16, #tpu.memory_space<vmem>>, vector<1x512xbf16>
    %11 = arith.extf %10 : vector<1x512xbf16> to vector<1x512xf32>
    %12 = vector.broadcast %11 : vector<1x512xf32> to vector<16x512xf32>
    %13 = arith.addf %8, %12 : vector<16x512xf32>
    %cst_5 = arith.constant 4.471500e-02 : f32
    %14 = vector.broadcast %cst_5 : f32 to vector<16x512xf32>
    %15 = arith.mulf %14, %13 : vector<16x512xf32>
    %16 = arith.mulf %15, %13 : vector<16x512xf32>
    %cst_6 = arith.constant 1.000000e+00 : f32
    %17 = vector.broadcast %cst_6 : f32 to vector<16x512xf32>
    %18 = arith.addf %17, %16 : vector<16x512xf32>
    %19 = arith.mulf %13, %18 : vector<16x512xf32>
    %cst_7 = arith.constant 5.000000e-01 : f32
    %20 = vector.broadcast %cst_7 : f32 to vector<16x512xf32>
    %21 = arith.mulf %20, %13 : vector<16x512xf32>
    %cst_8 = arith.constant 0.797884583 : f32
    %22 = vector.broadcast %cst_8 : f32 to vector<16x512xf32>
    %23 = arith.mulf %22, %19 : vector<16x512xf32>
    %24 = math.tanh %23 : vector<16x512xf32>
    %cst_9 = arith.constant 1.000000e+00 : f32
    %25 = vector.broadcast %cst_9 : f32 to vector<16x512xf32>
    %26 = arith.addf %25, %24 : vector<16x512xf32>
    %27 = arith.mulf %21, %26 : vector<16x512xf32>
    %c0_10 = arith.constant 0 : index
    %c0_11 = arith.constant 0 : index
    %28 = vector.load %arg8[%c0_10, %c0_11] : memref<16x128xf32, #tpu.memory_space<vmem>>, vector<16x128xf32>
    %29 = arith.truncf %27 : vector<16x512xf32> to vector<16x512xbf16>
    %30 = arith.index_cast %5 : i32 to index
    %c0_12 = arith.constant 0 : index
    %31 = vector.load %arg5[%30, %c0_12] : memref<512x128xbf16, #tpu.memory_space<vmem>>, vector<512x128xbf16>
    %cst_13 = arith.constant dense<0.000000e+00> : vector<16x128xf32>
    %32 = tpu.matmul %29, %31, %cst_13 {dimension_numbers = #tpu.dot_dimension_numbers<[1], [0], [0], [1], [0, 0, 1, 1], [], []>} : vector<16x512xbf16>, vector<512x128xbf16>, vector<16x128xf32> -> vector<16x128xf32>
    %33 = arith.addf %28, %32 : vector<16x128xf32>
    %c0_14 = arith.constant 0 : index
    %c0_15 = arith.constant 0 : index
    %34 = vector.load %arg8[%c0_14, %c0_15] : memref<16x128xf32, #tpu.memory_space<vmem>>, vector<16x128xf32>
    tpu.vector_store %arg8[%c0_14, %c0_15], %33 {strides = array<i32>} : memref<16x128xf32, #tpu.memory_space<vmem>>, vector<16x128xf32>,
    %c1_i32 = arith.constant 1 : i32
    %c0_i32_16 = arith.constant 0 : i32
    %35 = arith.cmpi eq, %arg1, %c0_i32_16 : i32
    %36 = arith.extui %35 : i1 to i32
    %c0_i32_17 = arith.constant 0 : i32
    %37 = arith.cmpi ne, %36, %c0_i32_17 : i32
    scf.if %37 {
      %c0_18 = arith.constant 0 : index
      %c0_19 = arith.constant 0 : index
      %38 = vector.load %arg8[%c0_18, %c0_19] : memref<16x128xf32, #tpu.memory_space<vmem>>, vector<16x128xf32>
      %c0_20 = arith.constant 0 : index
      %c0_21 = arith.constant 0 : index
      %39 = vector.load %arg6[%c0_20, %c0_21] : memref<1x128xbf16, #tpu.memory_space<vmem>>, vector<1x128xbf16>
      %40 = arith.extf %39 : vector<1x128xbf16> to vector<1x128xf32>
      %41 = vector.broadcast %40 : vector<1x128xf32> to vector<16x128xf32>
      %42 = arith.addf %38, %41 : vector<16x128xf32>
      %43 = arith.truncf %42 : vector<16x128xf32> to vector<16x128xbf16>
      %c0_22 = arith.constant 0 : index
      %c0_23 = arith.constant 0 : index
      %44 = vector.load %arg7[%c0_22, %c0_23] : memref<16x128xbf16, #tpu.memory_space<vmem>>, vector<16x128xbf16>
      tpu.vector_store %arg7[%c0_22, %c0_23], %43 {strides = array<i32>} : memref<16x128xbf16, #tpu.memory_space<vmem>>, vector<16x128xbf16>,
    } else {
    }
    return
  }
  func.func @transform_0(%arg0: i32, %arg1: i32) -> (i32, i32) {
    %c0_i32 = arith.constant 0 : i32
    %c0_i32_0 = arith.constant 0 : i32
    return %arg0, %c0_i32 : i32, i32
  }
  func.func @transform_1(%arg0: i32, %arg1: i32) -> (i32, i32) {
    %c0_i32 = arith.constant 0 : i32
    %c0_i32_0 = arith.constant 0 : i32
    return %c0_i32, %arg1 : i32, i32
  }
  func.func @transform_2(%arg0: i32, %arg1: i32) -> (i32, i32) {
    %c0_i32 = arith.constant 0 : i32
    %c0_i32_0 = arith.constant 0 : i32
    return %c0_i32, %arg1 : i32, i32
  }
  func.func @transform_3(%arg0: i32, %arg1: i32) -> (i32, i32) {
    %c0_i32 = arith.constant 0 : i32
    %c0_i32_0 = arith.constant 0 : i32
    return %arg1, %c0_i32 : i32, i32
  }
  func.func @transform_4(%arg0: i32, %arg1: i32) -> (i32, i32) {
    %c0_i32 = arith.constant 0 : i32
    %c0_i32_0 = arith.constant 0 : i32
    %c0_i32_1 = arith.constant 0 : i32
    return %c0_i32, %c0_i32_0 : i32, i32
  }
  func.func @transform_5(%arg0: i32, %arg1: i32) -> (i32, i32) {
    %c0_i32 = arith.constant 0 : i32
    %c0_i32_0 = arith.constant 0 : i32
    return %arg0, %c0_i32 : i32, i32
  }
}

</mosaic_0001>

<llo_original>
// kernel: mlp_forward.1
$region0: #{mlp_forward.1}
  #allocation0 [shape = 'u32[]', space=smem, size = 0x4, offset = 0x4, fixed_abs, tag = 'smem constant byte address 0x4 - core index']
  #allocation1 [shape = 'u32[144,128]{1,0:T(1,128)}', space=vmem, size = 0x12000, scoped, tag = 'internal scratch']
  #allocation2 [shape = 'f32[16,128]{1,0:T(8,128)}', space=vmem, size = 0x2000, scoped, tag = 'scratch operand']
  %s0 = inlined_call_operand.vmem [shape: bf16[16,128], index: 0, kind: input, shape index: {}]
  %s1 = inlined_call_operand.hbm [shape: bf16[128,512], index: 1, kind: input, shape index: {}]
  %s2 = inlined_call_operand.vmem [shape: bf16[1,512], index: 2, kind: input, shape index: {}]
  %s3 = inlined_call_operand.hbm [shape: bf16[512,128], index: 3, kind: input, shape index: {}]
  %s4 = inlined_call_operand.vmem [shape: bf16[1,128], index: 4, kind: input, shape index: {}]
  %s5 = inlined_call_operand.hbm [shape: bf16[16,128], index: 5, kind: output, shape index: {}]
  %s6 = sld [smem:[#allocation0]]
  $region46: #{mlp_forward.1} parent=0
    _
  %s8 = ssub.s32 1, %s6
  %s9 = scalar_select 0, %s8, %s6
  $region1: #{mlp_forward.1} parent=0
    #allocation3 [shape = 'u8[131072]{0}', space=vmem, size = 0x20000, scoped, tag = 'input window, operand 1, single buffered']
    #allocation4 [shape = 's32[1]{0}', space=sflag, size = 0x4, scoped, tag = 'scoped memory for mlp_forward.1']
    #allocation5 [shape = 's32[1]{0}', space=sflag, size = 0x4, scoped, tag = 'scoped memory for mlp_forward.1']
    #allocation6 [shape = 'u8[131072]{0}', space=vmem, size = 0x20000, scoped, tag = 'input window, operand 3, single buffered']
    #allocation7 [shape = 's32[1]{0}', space=sflag, size = 0x4, scoped, tag = 'scoped memory for mlp_forward.1']
    #allocation8 [shape = 'u8[4096]{0}', space=vmem, size = 0x1000, scoped, tag = 'output window, operand 0, single buffered']
    %10 = vsyncpa [#allocation4], 0
    %11 = vsyncpa [#allocation7], 0
    %12 = vsyncpa [#allocation5], 0
    // Predicated region
    $region2: #{mlp_forward.1} parent=1 // pred_check
      _
    $region3: #{mlp_forward.1} parent=1 // pred_check_branch
      %14 = sbr.rel (0) target = $region5
    $region4: #{mlp_forward.1} parent=1 // pred_region
      _
    $region5: #{mlp_forward.1} parent=1 // pred_fallthru
      _
    // Predicated region
    $region6: #{mlp_forward.1} parent=1 // pred_check
      _
    $region7: #{mlp_forward.1} parent=1 // pred_check_branch
      %16 = sbr.rel (0) target = $region9
    $region8: #{mlp_forward.1} parent=1 // pred_region
      %s18 = ssub.s32 4096, 4096
      %19 = vsyncadd [#allocation4], %s18
      %s20 = sshll.u32 [#allocation3], 4
      %s21 = int_to_ptr.vmem [resolvable:$true] %s20
      %26 = dma.hbm_to_vmem [thread:$0]  %s1, 4096, %s21, [#allocation4], 256, 256, 16
    $region9: #{mlp_forward.1} parent=1 // pred_fallthru
      _
    // Predicated region
    $region10: #{mlp_forward.1} parent=1 // pred_check
      _
    $region11: #{mlp_forward.1} parent=1 // pred_check_branch
      %28 = sbr.rel (0) target = $region13
    $region12: #{mlp_forward.1} parent=1 // pred_region
      _
    $region13: #{mlp_forward.1} parent=1 // pred_fallthru
      _
    // Predicated region
    $region14: #{mlp_forward.1} parent=1 // pred_check
      _
    $region15: #{mlp_forward.1} parent=1 // pred_check_branch
      %30 = sbr.rel (0) target = $region17
    $region16: #{mlp_forward.1} parent=1 // pred_region
      %s32 = ssub.s32 4096, 4096
      %33 = vsyncadd [#allocation7], %s32
      %s34 = sshll.u32 [#allocation6], 4
      %s35 = int_to_ptr.vmem [resolvable:$true] %s34
      %40 = dma.hbm_to_vmem [thread:$0]  %s3, 4096, %s35, [#allocation7], 64, 64, 4
    $region17: #{mlp_forward.1} parent=1 // pred_fallthru
      _
    // Predicated region
    $region18: #{mlp_forward.1} parent=1 // pred_check
      _
    $region19: #{mlp_forward.1} parent=1 // pred_check_branch
      %42 = sbr.rel (0) target = $region21
    $region20: #{mlp_forward.1} parent=1 // pred_region
      _
    $region21: #{mlp_forward.1} parent=1 // pred_fallthru
      _
    // Predicated region
    $region22: #{mlp_forward.1} parent=1 // pred_check
      _
    $region23: #{mlp_forward.1} parent=1 // pred_check_branch
      %44 = sbr.rel (0) target = $region25
    $region24: #{mlp_forward.1} parent=1 // pred_region
      %45 = dma.done [#allocation4], 4096
    $region25: #{mlp_forward.1} parent=1 // pred_fallthru
      _
    // Predicated region
    $region26: #{mlp_forward.1} parent=1 // pred_check
      _
    $region27: #{mlp_forward.1} parent=1 // pred_check_branch
      %47 = sbr.rel (0) target = $region29
    $region28: #{mlp_forward.1} parent=1 // pred_region
      %48 = dma.done [#allocation7], 4096
    $region29: #{mlp_forward.1} parent=1 // pred_fallthru
      _
    %p50 = scmp.eq.s32.totalorder 0, 0
    // Predicated region
    $region30: #{mlp_forward.1} parent=1 // pred_check
      %p51 = pneg %p50
    $region31: #{mlp_forward.1} parent=1 // pred_check_branch
      %53 = sbr.rel (%p51) target = $region33
    $region32: #{mlp_forward.1} parent=1 // pred_region
      %54 = vst [vmem:[#allocation2] sm:$0xff] 0.0
      %55 = vst [vmem:[#allocation2 + $0x8] sm:$0xff] 0.0
    $region33: #{mlp_forward.1} parent=1 // pred_fallthru
      _
    %v56 = vld [vmem:[%s0] sm:$0xf]
    %v57 = vld [vmem:[%s0 + $0x4] sm:$0xf]
    %v58 = vld [vmem:[#allocation3] sm:$0xff]
    %v59 = vld [vmem:[#allocation3 + $0x8] sm:$0xff]
    %v60 = vld [vmem:[#allocation3 + $0x10] sm:$0xff]
    %v61 = vld [vmem:[#allocation3 + $0x18] sm:$0xff]
    %v62 = vld [vmem:[#allocation3 + $0x20] sm:$0xff]
    %v63 = vld [vmem:[#allocation3 + $0x28] sm:$0xff]
    %v64 = vld [vmem:[#allocation3 + $0x30] sm:$0xff]
    %v65 = vld [vmem:[#allocation3 + $0x38] sm:$0xff]
    %v66 = vld [vmem:[#allocation3 + $0x40] sm:$0xff]
    %v67 = vld [vmem:[#allocation3 + $0x48] sm:$0xff]
    %v68 = vld [vmem:[#allocation3 + $0x50] sm:$0xff]
    %v69 = vld [vmem:[#allocation3 + $0x58] sm:$0xff]
    %v70 = vld [vmem:[#allocation3 + $0x60] sm:$0xff]
    %v71 = vld [vmem:[#allocation3 + $0x68] sm:$0xff]
    %v72 = vld [vmem:[#allocation3 + $0x70] sm:$0xff]
    %v73 = vld [vmem:[#allocation3 + $0x78] sm:$0xff]
    %v74 = vld [vmem:[#allocation3 + $0x80] sm:$0xff]
    %v75 = vld [vmem:[#allocation3 + $0x88] sm:$0xff]
    %v76 = vld [vmem:[#allocation3 + $0x90] sm:$0xff]
    %v77 = vld [vmem:[#allocation3 + $0x98] sm:$0xff]
    %v78 = vld [vmem:[#allocation3 + $0xa0] sm:$0xff]
    %v79 = vld [vmem:[#allocation3 + $0xa8] sm:$0xff]
    %v80 = vld [vmem:[#allocation3 + $0xb0] sm:$0xff]
    %v81 = vld [vmem:[#allocation3 + $0xb8] sm:$0xff]
    %v82 = vld [vmem:[#allocation3 + $0xc0] sm:$0xff]
    %v83 = vld [vmem:[#allocation3 + $0xc8] sm:$0xff]
    %v84 = vld [vmem:[#allocation3 + $0xd0] sm:$0xff]
    %v85 = vld [vmem:[#allocation3 + $0xd8] sm:$0xff]
    %v86 = vld [vmem:[#allocation3 + $0xe0] sm:$0xff]
    %v87 = vld [vmem:[#allocation3 + $0xe8] sm:$0xff]
    %v88 = vld [vmem:[#allocation3 + $0xf0] sm:$0xff]
    %v89 = vld [vmem:[#allocation3 + $0xf8] sm:$0xff]
    %v90 = vld [vmem:[%s2] sm:$0xf]
    %v91 = vunpack.c.l.bf16 %v90
    %v93 = vlaneseq
    %v94 = vshrl.u32 %v93, 7
    %v95 = vsub.s32 0, %v94
    %v96 = vrot.slane %v91, %v95
    %v97 = vlaneseq
    %v98 = vshrl.u32 %v97, 7
    %v99 = vsub.s32 2, %v98
    %v100 = vrot.slane %v91, %v99
    %v101 = vlaneseq
    %v102 = vshrl.u32 %v101, 7
    %v103 = vsub.s32 4, %v102
    %v104 = vrot.slane %v91, %v103
    %v105 = vlaneseq
    %v106 = vshrl.u32 %v105, 7
    %v107 = vsub.s32 6, %v106
    %v108 = vrot.slane %v91, %v107
    %v113 = vlaneseq
    %v114 = vshrl.u32 %v113, 7
    %v115 = vsub.s32 0, %v114
    %v116 = vrot.slane %v96, %v115
    %v117 = vlaneseq
    %v118 = vshrl.u32 %v117, 7
    %v119 = vsub.s32 0, %v118
    %v120 = vrot.slane %v100, %v119
    %v121 = vlaneseq
    %v122 = vshrl.u32 %v121, 7
    %v123 = vsub.s32 0, %v122
    %v124 = vrot.slane %v104, %v123
    %v125 = vlaneseq
    %v126 = vshrl.u32 %v125, 7
    %v127 = vsub.s32 0, %v126
    %v128 = vrot.slane %v108, %v127
    %v131 = vunpack.c.l.b16 %v56
    %v132 = vunpack.c.l.b16 %v57
    %v133 = vpack.c.b16 %v132, %v131
    %v167 = vunpack.c.l.b16 %v58
    %v168 = vunpack.c.h.b16 %v58
    %v169 = vunpack.c.l.b16 %v59
    %v170 = vunpack.c.h.b16 %v59
    %v171 = vunpack.c.l.b16 %v60
    %v172 = vunpack.c.h.b16 %v60
    %v173 = vunpack.c.l.b16 %v61
    %v174 = vunpack.c.h.b16 %v61
    %v175 = vunpack.c.l.b16 %v62
    %v176 = vunpack.c.h.b16 %v62
    %v177 = vunpack.c.l.b16 %v63
    %v178 = vunpack.c.h.b16 %v63
    %v179 = vunpack.c.l.b16 %v64
    %v180 = vunpack.c.h.b16 %v64
    %v181 = vunpack.c.l.b16 %v65
    %v182 = vunpack.c.h.b16 %v65
    %v183 = vunpack.c.l.b16 %v66
    %v184 = vunpack.c.h.b16 %v66
    %v185 = vunpack.c.l.b16 %v67
    %v186 = vunpack.c.h.b16 %v67
    %v187 = vunpack.c.l.b16 %v68
    %v188 = vunpack.c.h.b16 %v68
    %v189 = vunpack.c.l.b16 %v69
    %v190 = vunpack.c.h.b16 %v69
    %v191 = vunpack.c.l.b16 %v70
    %v192 = vunpack.c.h.b16 %v70
    %v193 = vunpack.c.l.b16 %v71
    %v194 = vunpack.c.h.b16 %v71
    %v195 = vunpack.c.l.b16 %v72
    %v196 = vunpack.c.h.b16 %v72
    %v197 = vunpack.c.l.b16 %v73
    %v198 = vunpack.c.h.b16 %v73
    %v199 = vunpack.c.l.b16 %v74
    %v200 = vunpack.c.h.b16 %v74
    %v201 = vunpack.c.l.b16 %v75
    %v202 = vunpack.c.h.b16 %v75
    %v203 = vunpack.c.l.b16 %v76
    %v204 = vunpack.c.h.b16 %v76
    %v205 = vunpack.c.l.b16 %v77
    %v206 = vunpack.c.h.b16 %v77
    %v207 = vunpack.c.l.b16 %v78
    %v208 = vunpack.c.h.b16 %v78
    %v209 = vunpack.c.l.b16 %v79
    %v210 = vunpack.c.h.b16 %v79
    %v211 = vunpack.c.l.b16 %v80
    %v212 = vunpack.c.h.b16 %v80
    %v213 = vunpack.c.l.b16 %v81
    %v214 = vunpack.c.h.b16 %v81
    %v215 = vunpack.c.l.b16 %v82
    %v216 = vunpack.c.h.b16 %v82
    %v217 = vunpack.c.l.b16 %v83
    %v218 = vunpack.c.h.b16 %v83
    %v219 = vunpack.c.l.b16 %v84
    %v220 = vunpack.c.h.b16 %v84
    %v221 = vunpack.c.l.b16 %v85
    %v222 = vunpack.c.h.b16 %v85
    %v223 = vunpack.c.l.b16 %v86
    %v224 = vunpack.c.h.b16 %v86
    %v225 = vunpack.c.l.b16 %v87
    %v226 = vunpack.c.h.b16 %v87
    %v227 = vunpack.c.l.b16 %v88
    %v228 = vunpack.c.h.b16 %v88
    %v229 = vunpack.c.l.b16 %v89
    %v230 = vunpack.c.h.b16 %v89
    %v231 = vpack.c.b16 %v171, %v167
    %v232 = vpack.c.b16 %v172, %v168
    %v233 = vpack.c.b16 %v173, %v169
    %v234 = vpack.c.b16 %v174, %v170
    %v235 = vpack.c.b16 %v179, %v175
    %v236 = vpack.c.b16 %v180, %v176
    %v237 = vpack.c.b16 %v181, %v177
    %v238 = vpack.c.b16 %v182, %v178
    %v239 = vpack.c.b16 %v187, %v183
    %v240 = vpack.c.b16 %v188, %v184
    %v241 = vpack.c.b16 %v189, %v185
    %v242 = vpack.c.b16 %v190, %v186
    %v243 = vpack.c.b16 %v195, %v191
    %v244 = vpack.c.b16 %v196, %v192
    %v245 = vpack.c.b16 %v197, %v193
    %v246 = vpack.c.b16 %v198, %v194
    %v247 = vpack.c.b16 %v203, %v199
    %v248 = vpack.c.b16 %v204, %v200
    %v249 = vpack.c.b16 %v205, %v201
    %v250 = vpack.c.b16 %v206, %v202
    %v251 = vpack.c.b16 %v211, %v207
    %v252 = vpack.c.b16 %v212, %v208
    %v253 = vpack.c.b16 %v213, %v209
    %v254 = vpack.c.b16 %v214, %v210
    %v255 = vpack.c.b16 %v219, %v215
    %v256 = vpack.c.b16 %v220, %v216
    %v257 = vpack.c.b16 %v221, %v217
    %v258 = vpack.c.b16 %v222, %v218
    %v259 = vpack.c.b16 %v227, %v223
    %v260 = vpack.c.b16 %v228, %v224
    %v261 = vpack.c.b16 %v229, %v225
    %v262 = vpack.c.b16 %v230, %v226
    %295 = vmatprep.subr.bf16.mxu0 %v260
    %296 = vmatpush1.bf16.msra.mxu0 %v259
    %297 = vmatprep.subr.bf16.mxu0 %v256
    %298 = vmatpush1.bf16.msra.mxu0 %v255
    %299 = vmatprep.subr.bf16.mxu0 %v252
    %300 = vmatpush1.bf16.msra.mxu0 %v251
    %301 = vmatprep.subr.bf16.mxu0 %v248
    %302 = vmatpush1.bf16.msra.mxu0 %v247
    %303 = vmatprep.subr.bf16.mxu0 %v244
    %304 = vmatpush1.bf16.msra.mxu0 %v243
    %305 = vmatprep.subr.bf16.mxu0 %v240
    %306 = vmatpush1.bf16.msra.mxu0 %v239
    %307 = vmatprep.subr.bf16.mxu0 %v236
    %308 = vmatpush1.bf16.msra.mxu0 %v235
    %309 = vmatprep.subr.bf16.mxu0 %v232
    %310 = vmatpush1.bf16.msra.mxu0 %v231
    %311 = vmatprep.subr.bf16.mxu0 0
    %312 = vmatpush2.bf16.msra.mxu0 0
    %313 = vmatprep.subr.bf16.mxu0 0
    %314 = vmatpush2.bf16.msra.mxu0 0
    %315 = vmatprep.subr.bf16.mxu0 0
    %316 = vmatpush2.bf16.msra.mxu0 0
    %317 = vmatprep.subr.bf16.mxu0 0
    %318 = vmatpush2.bf16.msra.mxu0 0
    %319 = vmatprep.subr.bf16.mxu0 0
    %320 = vmatpush2.bf16.msra.mxu0 0
    %321 = vmatprep.subr.bf16.mxu0 0
    %322 = vmatpush2.bf16.msra.mxu0 0
    %323 = vmatprep.subr.bf16.mxu0 0
    %324 = vmatpush2.bf16.msra.mxu0 0
    %325 = vmatprep.subr.bf16.mxu0 0
    %326 = vmatpush2.bf16.msra.mxu0 0
    %327 = vmatprep.mubr.bf16.mxu0 0
    %328 = vmatmul.mubr.bf16.gmra.mxu0 %v133
    %v329 = vpop.f32.mrf.mxu0
    %v330 = vadd.f32 %v116, %v329
    %v331 = vpop.f32.mrf.mxu0
    %v332 = vadd.f32 %v120, %v331
    %v333 = vpop.f32.mrf.mxu0
    %v334 = vadd.f32 %v116, %v333
    %v335 = vpop.f32.mrf.mxu0
    %v336 = vadd.f32 %v120, %v335
    %337 = vdwg.mxu0
    %338 = vmatprep.subr.bf16.mxu0 %v262
    %339 = vmatpush1.bf16.msra.mxu0 %v261
    %340 = vmatprep.subr.bf16.mxu0 %v258
    %341 = vmatpush1.bf16.msra.mxu0 %v257
    %342 = vmatprep.subr.bf16.mxu0 %v254
    %343 = vmatpush1.bf16.msra.mxu0 %v253
    %344 = vmatprep.subr.bf16.mxu0 %v250
    %345 = vmatpush1.bf16.msra.mxu0 %v249
    %346 = vmatprep.subr.bf16.mxu0 %v246
    %347 = vmatpush1.bf16.msra.mxu0 %v245
    %348 = vmatprep.subr.bf16.mxu0 %v242
    %349 = vmatpush1.bf16.msra.mxu0 %v241
    %350 = vmatprep.subr.bf16.mxu0 %v238
    %351 = vmatpush1.bf16.msra.mxu0 %v237
    %352 = vmatprep.subr.bf16.mxu0 %v234
    %353 = vmatpush1.bf16.msra.mxu0 %v233
    %354 = vmatprep.subr.bf16.mxu0 0
    %355 = vmatpush2.bf16.msra.mxu0 0
    %356 = vmatprep.subr.bf16.mxu0 0
    %357 = vmatpush2.bf16.msra.mxu0 0
    %358 = vmatprep.subr.bf16.mxu0 0
    %359 = vmatpush2.bf16.msra.mxu0 0
    %360 = vmatprep.subr.bf16.mxu0 0
    %361 = vmatpush2.bf16.msra.mxu0 0
    %362 = vmatprep.subr.bf16.mxu0 0
    %363 = vmatpush2.bf16.msra.mxu0 0
    %364 = vmatprep.subr.bf16.mxu0 0
    %365 = vmatpush2.bf16.msra.mxu0 0
    %366 = vmatprep.subr.bf16.mxu0 0
    %367 = vmatpush2.bf16.msra.mxu0 0
    %368 = vmatprep.subr.bf16.mxu0 0
    %369 = vmatpush2.bf16.msra.mxu0 0
    %370 = vmatprep.mubr.bf16.mxu0 0
    %371 = vmatmul.mubr.bf16.gmra.mxu0 %v133
    %v372 = vpop.f32.mrf.mxu0
    %v373 = vadd.f32 %v124, %v372
    %v374 = vpop.f32.mrf.mxu0
    %v375 = vadd.f32 %v128, %v374
    %v376 = vpop.f32.mrf.mxu0
    %v377 = vadd.f32 %v124, %v376
    %v378 = vpop.f32.mrf.mxu0
    %v379 = vadd.f32 %v128, %v378
    %380 = vdwg.mxu0
    %v381 = vmul.f32 %v330, 0.044715
    %v382 = vmul.f32 %v332, 0.044715
    %v383 = vmul.f32 %v373, 0.044715
    %v384 = vmul.f32 %v375, 0.044715
    %v385 = vmul.f32 %v334, 0.044715
    %v386 = vmul.f32 %v336, 0.044715
    %v387 = vmul.f32 %v377, 0.044715
    %v388 = vmul.f32 %v379, 0.044715
    %v389 = vmul.f32 %v381, %v330
    %v390 = vmul.f32 %v382, %v332
    %v391 = vmul.f32 %v383, %v373
    %v392 = vmul.f32 %v384, %v375
    %v393 = vmul.f32 %v385, %v334
    %v394 = vmul.f32 %v386, %v336
    %v395 = vmul.f32 %v387, %v377
    %v396 = vmul.f32 %v388, %v379
    %v397 = vadd.f32 %v389, 1.0
    %v398 = vadd.f32 %v390, 1.0
    %v399 = vadd.f32 %v391, 1.0
    %v400 = vadd.f32 %v392, 1.0
    %v401 = vadd.f32 %v393, 1.0
    %v402 = vadd.f32 %v394, 1.0
    %v403 = vadd.f32 %v395, 1.0
    %v404 = vadd.f32 %v396, 1.0
    %v405 = vmul.f32 %v330, %v397
    %v406 = vmul.f32 %v332, %v398
    %v407 = vmul.f32 %v373, %v399
    %v408 = vmul.f32 %v375, %v400
    %v409 = vmul.f32 %v334, %v401
    %v410 = vmul.f32 %v336, %v402
    %v411 = vmul.f32 %v377, %v403
    %v412 = vmul.f32 %v379, %v404
    %v413 = vmul.f32 %v330, 0.5
    %v414 = vmul.f32 %v332, 0.5
    %v415 = vmul.f32 %v373, 0.5
    %v416 = vmul.f32 %v375, 0.5
    %v417 = vmul.f32 %v334, 0.5
    %v418 = vmul.f32 %v336, 0.5
    %v419 = vmul.f32 %v377, 0.5
    %v420 = vmul.f32 %v379, 0.5
    %v421 = vmul.f32 %v405, 0.7978846
    %v422 = vmul.f32 %v406, 0.7978846
    %v423 = vmul.f32 %v407, 0.7978846
    %v424 = vmul.f32 %v408, 0.7978846
    %v425 = vmul.f32 %v409, 0.7978846
    %v426 = vmul.f32 %v410, 0.7978846
    %v427 = vmul.f32 %v411, 0.7978846
    %v428 = vmul.f32 %v412, 0.7978846
    %v429 = vtanh.pop %v421
    %v430 = vtanh.pop %v422
    %v431 = vtanh.pop %v423
    %v432 = vtanh.pop %v424
    %v433 = vtanh.pop %v425
    %v434 = vtanh.pop %v426
    %v435 = vtanh.pop %v427
    %v436 = vtanh.pop %v428
    %v437 = vadd.f32 %v429, 1.0
    %v438 = vadd.f32 %v430, 1.0
    %v439 = vadd.f32 %v431, 1.0
    %v440 = vadd.f32 %v432, 1.0
    %v441 = vadd.f32 %v433, 1.0
    %v442 = vadd.f32 %v434, 1.0
    %v443 = vadd.f32 %v435, 1.0
    %v444 = vadd.f32 %v436, 1.0
    %v445 = vmul.f32 %v413, %v437
    %v446 = vmul.f32 %v414, %v438
    %v447 = vmul.f32 %v415, %v439
    %v448 = vmul.f32 %v416, %v440
    %v449 = vmul.f32 %v417, %v441
    %v450 = vmul.f32 %v418, %v442
    %v451 = vmul.f32 %v419, %v443
    %v452 = vmul.f32 %v420, %v444
    %v453 = vld [vmem:[#allocation2] sm:$0xff]
    %v454 = vld [vmem:[#allocation2 + $0x8] sm:$0xff]
    %v455 = vpack.c.bf16 %v449, %v445
    %v456 = vpack.c.bf16 %v450, %v446
    %v457 = vpack.c.bf16 %v451, %v447
    %v458 = vpack.c.bf16 %v452, %v448
    %v459 = vld [vmem:[#allocation6] sm:$0xf]
    %v460 = vld [vmem:[#allocation6 + $0x4] sm:$0xf]
    %v461 = vld [vmem:[#allocation6 + $0x8] sm:$0xf]
    %v462 = vld [vmem:[#allocation6 + $0xc] sm:$0xf]
    %v463 = vld [vmem:[#allocation6 + $0x10] sm:$0xf]
    %v464 = vld [vmem:[#allocation6 + $0x14] sm:$0xf]
    %v465 = vld [vmem:[#allocation6 + $0x18] sm:$0xf]
    %v466 = vld [vmem:[#allocation6 + $0x1c] sm:$0xf]
    %v467 = vld [vmem:[#allocation6 + $0x20] sm:$0xf]
    %v468 = vld [vmem:[#allocation6 + $0x24] sm:$0xf]
    %v469 = vld [vmem:[#allocation6 + $0x28] sm:$0xf]
    %v470 = vld [vmem:[#allocation6 + $0x2c] sm:$0xf]
    %v471 = vld [vmem:[#allocation6 + $0x30] sm:$0xf]
    %v472 = vld [vmem:[#allocation6 + $0x34] sm:$0xf]
    %v473 = vld [vmem:[#allocation6 + $0x38] sm:$0xf]
    %v474 = vld [vmem:[#allocation6 + $0x3c] sm:$0xf]
    %v475 = vld [vmem:[#allocation6 + $0x40] sm:$0xf]
    %v476 = vld [vmem:[#allocation6 + $0x44] sm:$0xf]
    %v477 = vld [vmem:[#allocation6 + $0x48] sm:$0xf]
    %v478 = vld [vmem:[#allocation6 + $0x4c] sm:$0xf]
    %v479 = vld [vmem:[#allocation6 + $0x50] sm:$0xf]
    %v480 = vld [vmem:[#allocation6 + $0x54] sm:$0xf]
    %v481 = vld [vmem:[#allocation6 + $0x58] sm:$0xf]
    %v482 = vld [vmem:[#allocation6 + $0x5c] sm:$0xf]
    %v483 = vld [vmem:[#allocation6 + $0x60] sm:$0xf]
    %v484 = vld [vmem:[#allocation6 + $0x64] sm:$0xf]
    %v485 = vld [vmem:[#allocation6 + $0x68] sm:$0xf]
    %v486 = vld [vmem:[#allocation6 + $0x6c] sm:$0xf]
    %v487 = vld [vmem:[#allocation6 + $0x70] sm:$0xf]
    %v488 = vld [vmem:[#allocation6 + $0x74] sm:$0xf]
    %v489 = vld [vmem:[#allocation6 + $0x78] sm:$0xf]
    %v490 = vld [vmem:[#allocation6 + $0x7c] sm:$0xf]
    %v491 = vld [vmem:[#allocation6 + $0x80] sm:$0xf]
    %v492 = vld [vmem:[#allocation6 + $0x84] sm:$0xf]
    %v493 = vld [vmem:[#allocation6 + $0x88] sm:$0xf]
    %v494 = vld [vmem:[#allocation6 + $0x8c] sm:$0xf]
    %v495 = vld [vmem:[#allocation6 + $0x90] sm:$0xf]
    %v496 = vld [vmem:[#allocation6 + $0x94] sm:$0xf]
    %v497 = vld [vmem:[#allocation6 + $0x98] sm:$0xf]
    %v498 = vld [vmem:[#allocation6 + $0x9c] sm:$0xf]
    %v499 = vld [vmem:[#allocation6 + $0xa0] sm:$0xf]
    %v500 = vld [vmem:[#allocation6 + $0xa4] sm:$0xf]
    %v501 = vld [vmem:[#allocation6 + $0xa8] sm:$0xf]
    %v502 = vld [vmem:[#allocation6 + $0xac] sm:$0xf]
    %v503 = vld [vmem:[#allocation6 + $0xb0] sm:$0xf]
    %v504 = vld [vmem:[#allocation6 + $0xb4] sm:$0xf]
    %v505 = vld [vmem:[#allocation6 + $0xb8] sm:$0xf]
    %v506 = vld [vmem:[#allocation6 + $0xbc] sm:$0xf]
    %v507 = vld [vmem:[#allocation6 + $0xc0] sm:$0xf]
    %v508 = vld [vmem:[#allocation6 + $0xc4] sm:$0xf]
    %v509 = vld [vmem:[#allocation6 + $0xc8] sm:$0xf]
    %v510 = vld [vmem:[#allocation6 + $0xcc] sm:$0xf]
    %v511 = vld [vmem:[#allocation6 + $0xd0] sm:$0xf]
    %v512 = vld [vmem:[#allocation6 + $0xd4] sm:$0xf]
    %v513 = vld [vmem:[#allocation6 + $0xd8] sm:$0xf]
    %v514 = vld [vmem:[#allocation6 + $0xdc] sm:$0xf]
    %v515 = vld [vmem:[#allocation6 + $0xe0] sm:$0xf]
    %v516 = vld [vmem:[#allocation6 + $0xe4] sm:$0xf]
    %v517 = vld [vmem:[#allocation6 + $0xe8] sm:$0xf]
    %v518 = vld [vmem:[#allocation6 + $0xec] sm:$0xf]
    %v519 = vld [vmem:[#allocation6 + $0xf0] sm:$0xf]
    %v520 = vld [vmem:[#allocation6 + $0xf4] sm:$0xf]
    %v521 = vld [vmem:[#allocation6 + $0xf8] sm:$0xf]
    %v522 = vld [vmem:[#allocation6 + $0xfc] sm:$0xf]
    %v587 = vunpack.c.l.b16 %v459
    %v588 = vunpack.c.l.b16 %v460
    %v589 = vunpack.c.l.b16 %v461
    %v590 = vunpack.c.l.b16 %v462
    %v591 = vunpack.c.l.b16 %v463
    %v592 = vunpack.c.l.b16 %v464
    %v593 = vunpack.c.l.b16 %v465
    %v594 = vunpack.c.l.b16 %v466
    %v595 = vunpack.c.l.b16 %v467
    %v596 = vunpack.c.l.b16 %v468
    %v597 = vunpack.c.l.b16 %v469
    %v598 = vunpack.c.l.b16 %v470
    %v599 = vunpack.c.l.b16 %v471
    %v600 = vunpack.c.l.b16 %v472
    %v601 = vunpack.c.l.b16 %v473
    %v602 = vunpack.c.l.b16 %v474
    %v603 = vunpack.c.l.b16 %v475
    %v604 = vunpack.c.l.b16 %v476
    %v605 = vunpack.c.l.b16 %v477
    %v606 = vunpack.c.l.b16 %v478
    %v607 = vunpack.c.l.b16 %v479
    %v608 = vunpack.c.l.b16 %v480
    %v609 = vunpack.c.l.b16 %v481
    %v610 = vunpack.c.l.b16 %v482
    %v611 = vunpack.c.l.b16 %v483
    %v612 = vunpack.c.l.b16 %v484
    %v613 = vunpack.c.l.b16 %v485
    %v614 = vunpack.c.l.b16 %v486
    %v615 = vunpack.c.l.b16 %v487
    %v616 = vunpack.c.l.b16 %v488
    %v617 = vunpack.c.l.b16 %v489
    %v618 = vunpack.c.l.b16 %v490
    %v619 = vunpack.c.l.b16 %v491
    %v620 = vunpack.c.l.b16 %v492
    %v621 = vunpack.c.l.b16 %v493
    %v622 = vunpack.c.l.b16 %v494
    %v623 = vunpack.c.l.b16 %v495
    %v624 = vunpack.c.l.b16 %v496
    %v625 = vunpack.c.l.b16 %v497
    %v626 = vunpack.c.l.b16 %v498
    %v627 = vunpack.c.l.b16 %v499
    %v628 = vunpack.c.l.b16 %v500
    %v629 = vunpack.c.l.b16 %v501
    %v630 = vunpack.c.l.b16 %v502
    %v631 = vunpack.c.l.b16 %v503
    %v632 = vunpack.c.l.b16 %v504
    %v633 = vunpack.c.l.b16 %v505
    %v634 = vunpack.c.l.b16 %v506
    %v635 = vunpack.c.l.b16 %v507
    %v636 = vunpack.c.l.b16 %v508
    %v637 = vunpack.c.l.b16 %v509
    %v638 = vunpack.c.l.b16 %v510
    %v639 = vunpack.c.l.b16 %v511
    %v640 = vunpack.c.l.b16 %v512
    %v641 = vunpack.c.l.b16 %v513
    %v642 = vunpack.c.l.b16 %v514
    %v643 = vunpack.c.l.b16 %v515
    %v644 = vunpack.c.l.b16 %v516
    %v645 = vunpack.c.l.b16 %v517
    %v646 = vunpack.c.l.b16 %v518
    %v647 = vunpack.c.l.b16 %v519
    %v648 = vunpack.c.l.b16 %v520
    %v649 = vunpack.c.l.b16 %v521
    %v650 = vunpack.c.l.b16 %v522
    %v651 = vpack.c.b16 %v588, %v587
    %v652 = vpack.c.b16 %v590, %v589
    %v653 = vpack.c.b16 %v592, %v591
    %v654 = vpack.c.b16 %v594, %v593
    %v655 = vpack.c.b16 %v596, %v595
    %v656 = vpack.c.b16 %v598, %v597
    %v657 = vpack.c.b16 %v600, %v599
    %v658 = vpack.c.b16 %v602, %v601
    %v659 = vpack.c.b16 %v604, %v603
    %v660 = vpack.c.b16 %v606, %v605
    %v661 = vpack.c.b16 %v608, %v607
    %v662 = vpack.c.b16 %v610, %v609
    %v663 = vpack.c.b16 %v612, %v611
    %v664 = vpack.c.b16 %v614, %v613
    %v665 = vpack.c.b16 %v616, %v615
    %v666 = vpack.c.b16 %v618, %v617
    %v667 = vpack.c.b16 %v620, %v619
    %v668 = vpack.c.b16 %v622, %v621
    %v669 = vpack.c.b16 %v624, %v623
    %v670 = vpack.c.b16 %v626, %v625
    %v671 = vpack.c.b16 %v628, %v627
    %v672 = vpack.c.b16 %v630, %v629
    %v673 = vpack.c.b16 %v632, %v631
    %v674 = vpack.c.b16 %v634, %v633
    %v675 = vpack.c.b16 %v636, %v635
    %v676 = vpack.c.b16 %v638, %v637
    %v677 = vpack.c.b16 %v640, %v639
    %v678 = vpack.c.b16 %v642, %v641
    %v679 = vpack.c.b16 %v644, %v643
    %v680 = vpack.c.b16 %v646, %v645
    %v681 = vpack.c.b16 %v648, %v647
    %v682 = vpack.c.b16 %v650, %v649
    %715 = vmatprep.subr.bf16.mxu0 0
    %716 = vmatpush1.bf16.msra.mxu0 %v658
    %717 = vmatprep.subr.bf16.mxu0 0
    %718 = vmatpush1.bf16.msra.mxu0 %v657
    %719 = vmatprep.subr.bf16.mxu0 0
    %720 = vmatpush1.bf16.msra.mxu0 %v656
    %721 = vmatprep.subr.bf16.mxu0 0
    %722 = vmatpush1.bf16.msra.mxu0 %v655
    %723 = vmatprep.subr.bf16.mxu0 0
    %724 = vmatpush1.bf16.msra.mxu0 %v654
    %725 = vmatprep.subr.bf16.mxu0 0
    %726 = vmatpush1.bf16.msra.mxu0 %v653
    %727 = vmatprep.subr.bf16.mxu0 0
    %728 = vmatpush1.bf16.msra.mxu0 %v652
    %729 = vmatprep.subr.bf16.mxu0 0
    %730 = vmatpush1.bf16.msra.mxu0 %v651
    %731 = vmatprep.subr.bf16.mxu0 0
    %732 = vmatpush2.bf16.msra.mxu0 %v666
    %733 = vmatprep.subr.bf16.mxu0 0
    %734 = vmatpush2.bf16.msra.mxu0 %v665
    %735 = vmatprep.subr.bf16.mxu0 0
    %736 = vmatpush2.bf16.msra.mxu0 %v664
    %737 = vmatprep.subr.bf16.mxu0 0
    %738 = vmatpush2.bf16.msra.mxu0 %v663
    %739 = vmatprep.subr.bf16.mxu0 0
    %740 = vmatpush2.bf16.msra.mxu0 %v662
    %741 = vmatprep.subr.bf16.mxu0 0
    %742 = vmatpush2.bf16.msra.mxu0 %v661
    %743 = vmatprep.subr.bf16.mxu0 0
    %744 = vmatpush2.bf16.msra.mxu0 %v660
    %745 = vmatprep.subr.bf16.mxu0 0
    %746 = vmatpush2.bf16.msra.mxu0 %v659
    %747 = vmatprep.mubr.bf16.mxu0 %v456
    %748 = vmatmul.mubr.bf16.gmra.mxu0 %v455
    %v749 = vpop.f32.mrf.mxu0
    %v750 = vadd.f32 0.0, %v749
    %v751 = vpop.f32.mrf.mxu0
    %v752 = vpop.f32.mrf.mxu0
    %v753 = vadd.f32 0.0, %v752
    %v754 = vpop.f32.mrf.mxu0
    %755 = vdwg.mxu0
    %756 = vmatprep.subr.bf16.mxu0 0
    %757 = vmatpush1.bf16.msra.mxu0 %v674
    %758 = vmatprep.subr.bf16.mxu0 0
    %759 = vmatpush1.bf16.msra.mxu0 %v673
    %760 = vmatprep.subr.bf16.mxu0 0
    %761 = vmatpush1.bf16.msra.mxu0 %v672
    %762 = vmatprep.subr.bf16.mxu0 0
    %763 = vmatpush1.bf16.msra.mxu0 %v671
    %764 = vmatprep.subr.bf16.mxu0 0
    %765 = vmatpush1.bf16.msra.mxu0 %v670
    %766 = vmatprep.subr.bf16.mxu0 0
    %767 = vmatpush1.bf16.msra.mxu0 %v669
    %768 = vmatprep.subr.bf16.mxu0 0
    %769 = vmatpush1.bf16.msra.mxu0 %v668
    %770 = vmatprep.subr.bf16.mxu0 0
    %771 = vmatpush1.bf16.msra.mxu0 %v667
    %772 = vmatprep.subr.bf16.mxu0 0
    %773 = vmatpush2.bf16.msra.mxu0 %v682
    %774 = vmatprep.subr.bf16.mxu0 0
    %775 = vmatpush2.bf16.msra.mxu0 %v681
    %776 = vmatprep.subr.bf16.mxu0 0
    %777 = vmatpush2.bf16.msra.mxu0 %v680
    %778 = vmatprep.subr.bf16.mxu0 0
    %779 = vmatpush2.bf16.msra.mxu0 %v679
    %780 = vmatprep.subr.bf16.mxu0 0
    %781 = vmatpush2.bf16.msra.mxu0 %v678
    %782 = vmatprep.subr.bf16.mxu0 0
    %783 = vmatpush2.bf16.msra.mxu0 %v677
    %784 = vmatprep.subr.bf16.mxu0 0
    %785 = vmatpush2.bf16.msra.mxu0 %v676
    %786 = vmatprep.subr.bf16.mxu0 0
    %787 = vmatpush2.bf16.msra.mxu0 %v675
    %788 = vmatprep.mubr.bf16.mxu0 %v458
    %789 = vmatmul.mubr.bf16.gmra.mxu0 %v457
    %v790 = vpop.f32.mrf.mxu0
    %v791 = vadd.f32 %v750, %v790
    %v792 = vpop.f32.mrf.mxu0
    %v793 = vpop.f32.mrf.mxu0
    %v794 = vadd.f32 %v753, %v793
    %v795 = vpop.f32.mrf.mxu0
    %796 = vdwg.mxu0
    %v797 = vadd.f32 %v453, %v791
    %v798 = vadd.f32 %v454, %v794
    %799 = vst [vmem:[#allocation2] sm:$0xff] %v797
    %800 = vst [vmem:[#allocation2 + $0x8] sm:$0xff] %v798
    // Predicated region
    $region34: #{mlp_forward.1} parent=1 // pred_check
      %p801 = pneg %p50
    $region35: #{mlp_forward.1} parent=1 // pred_check_branch
      %803 = sbr.rel (%p801) target = $region37
    $region36: #{mlp_forward.1} parent=1 // pred_region
      %v804 = vld [vmem:[#allocation2] sm:$0xff]
      %v805 = vld [vmem:[#allocation2 + $0x8] sm:$0xff]
      %v806 = vld [vmem:[%s4] sm:$0x1]
      %v807 = vunpack.c.l.bf16 %v806
      %v808 = vlaneseq
      %v809 = vshrl.u32 %v808, 7
      %v810 = vsub.s32 0, %v809
      %v811 = vrot.slane %v807, %v810
      %v812 = vadd.f32 %v804, %v811
      %v813 = vadd.f32 %v805, %v811
      %v814 = vpack.c.bf16 %v813, %v812
      %v816 = vunpack.c.l.b16 %v814
      %v817 = vunpack.c.h.b16 %v814
      %v818 = vpack.c.b16 %v816, %v816
      %v819 = vpack.c.b16 %v817, %v817
      %822 = vst [vmem:[#allocation8] sm:$0xf] %v818
      %823 = vst [vmem:[#allocation8 + $0x4] sm:$0xf] %v819
    $region37: #{mlp_forward.1} parent=1 // pred_fallthru
      _
    // Predicated region
    $region38: #{mlp_forward.1} parent=1 // pred_check
      _
    $region39: #{mlp_forward.1} parent=1 // pred_check_branch
      %825 = sbr.rel (0) target = $region41
    $region40: #{mlp_forward.1} parent=1 // pred_region
      %s827 = ssub.s32 128, 128
      %828 = vsyncadd [#allocation5], %s827
      %s829 = sshll.u32 [#allocation8], 4
      %s830 = int_to_ptr.vmem [resolvable:$true] %s829
      %835 = dma.vmem_to_hbm [thread:$0]  %s830, 128, %s5, [#allocation5], 64, 64, 4
    $region41: #{mlp_forward.1} parent=1 // pred_fallthru
      _
    // Predicated region
    $region42: #{mlp_forward.1} parent=1 // pred_check
      _
    $region43: #{mlp_forward.1} parent=1 // pred_check_branch
      %837 = sbr.rel (0) target = $region45
    $region44: #{mlp_forward.1} parent=1 // pred_region
      %838 = dma.done [#allocation5], 128
    $region45: #{mlp_forward.1} parent=1 // pred_fallthru
      _
    %839 = vsyncpa [#allocation4], 1
    %840 = vsyncpa [#allocation7], 1
    %841 = vsyncpa [#allocation5], 1

</llo_original>
